<compile_context>
chip_gen: v5e
topology: v5e:2x2
jax: 0.10.0
libtpu: 0.0.40
codegen_flags: <defaults>
</compile_context>

<pallas_src>
import functools

import jax
import jax.numpy as jnp
from jax.experimental import pallas as pl
from jax.experimental.pallas import tpu as pltpu


def _round_up(x: int, m: int) -> int:
    return (x + m - 1) // m * m


def _he_loss_kernel(logits_ref, labels_ref, params_ref, n_ref, out_ref):
    """One N-tile: writes [sum(s*target), sum(numerator - log(denominator))]."""
    t, c = logits_ref.shape

    s = params_ref[0]
    cm = params_ref[1]
    s_cm = s * cm
    n_true = n_ref[0]

    # Row-validity mask for the (possibly ragged) last tile.  Garbage rows are
    # zeroed BEFORE any exp/max/log so every downstream value stays finite.
    row_idx = (pl.program_id(0) * t
               + jax.lax.broadcasted_iota(jnp.int32, (t, 1), 0))     # [T, 1]
    valid = row_idx < n_true                                          # [T, 1]

    x = jnp.where(valid, logits_ref[...].astype(jnp.float32), 0.0)    # [T, C]
    labels = labels_ref[...]                                          # [T, 1]

    col = jax.lax.broadcasted_iota(jnp.int32, (t, c), 1)              # [T, C]
    sel = col == labels                                               # [T, C]

    sx = s * x                                                        # s*logits
    # s * target_i  (select instead of one-hot multiply)
    target_s = jnp.sum(jnp.where(sel, sx, 0.0), axis=1, keepdims=True)  # [T, 1]
    numerator = target_s - s_cm                                          # [T, 1]

    # denominator = exp(s*(target-cm)) + sum_{j!=y} exp(s*logits_j)
    #             = sum_j exp(s*logits_j - s*cm*[j==y])
    # Stable logsumexp: subtract the per-row max before exponentiating.
    z = sx - jnp.where(sel, s_cm, 0.0)                                # [T, C]
    row_max = jnp.max(z, axis=1, keepdims=True)                       # [T, 1]
    sum_exp = jnp.sum(jnp.exp(z - row_max), axis=1, keepdims=True)    # [T, 1]
    log_denominator = row_max + jnp.log(sum_exp)                      # [T, 1]

    vmask = valid.astype(jnp.float32)
    sum_target_s = jnp.sum(vmask * target_s)                          # scalar
    sum_cls = jnp.sum(vmask * (numerator - log_denominator))          # scalar

    # Lane-dense (8, 128) partial-sum block: row 0 -> sum(s*target),
    # row 1 -> sum(numerator - log(denominator)), rest zero.
    row8 = jax.lax.broadcasted_iota(jnp.int32, (8, 128), 0)
    out_ref[...] = jnp.where(
        row8 == 0, sum_target_s,
        jnp.where(row8 == 1, sum_cls, jnp.float32(0.0)))


@functools.partial(jax.jit, static_argnames=("tile_n_max",))
def he_loss_lkh(logits, labels, s, r, cm=0.0, *, tile_n_max=2048):
    """Pallas implementation of HELoss_lkh.forward(logits, labels, cm)."""
    n, c = logits.shape
    itemsize = jnp.dtype(logits.dtype).itemsize

    # Generation-aware VMEM budget (v7x: 64 MiB physical; v5e/v6e: 128 MiB).
    try:
        vmem_cap = int(pltpu.get_tpu_info().vmem_capacity_bytes)
    except Exception:
        vmem_cap = 64 * 1024 * 1024  # conservative fallback, safe everywhere
    per_buf_budget = max(1 << 20, vmem_cap // 16)   # native-dtype logits tile
    vmem_limit = int(min(vmem_cap * 3 // 4, 96 * 1024 * 1024))

    # Row tile: as large as the VMEM budget allows, capped so we keep >= ~4
    # grid steps (v7x megacore sharding + DMA/compute pipeline overlap).
    tile_cap_budget = max(8, (per_buf_budget // max(1, c * itemsize)) // 8 * 8)
    tile_cap_grid = max(8, _round_up(-(-n // 4), 8))
    tile_n = min(tile_n_max, tile_cap_budget, tile_cap_grid)
    if tile_n >= n:
        tile_n = n          # block dim == full array dim is always legal
    num_tiles = -(-n // tile_n)

    labels2 = labels.astype(jnp.int32).reshape(n, 1)
    params = jnp.stack([jnp.asarray(s, jnp.float32),
                        jnp.asarray(cm, jnp.float32)])
    n_arr = jnp.asarray([n], jnp.int32)

    cost = pl.CostEstimate(
        flops=8 * n * c,
        transcendentals=n * c + n,
        bytes_accessed=(n * c * itemsize + n * 4 + num_tiles * 8 * 128 * 4),
    )

    partials = pl.pallas_call(
        _he_loss_kernel,
        out_shape=jax.ShapeDtypeStruct((num_tiles * 8, 128), jnp.float32),
        grid=(num_tiles,),
        in_specs=[
            pl.BlockSpec((tile_n, c), lambda i: (i, 0)),        # logits tile
            pl.BlockSpec((tile_n, 1), lambda i: (i, 0)),        # labels tile
            pl.BlockSpec(memory_space=pltpu.SMEM),              # [s, cm]
            pl.BlockSpec(memory_space=pltpu.SMEM),              # [true N]
        ],
        out_specs=pl.BlockSpec((8, 128), lambda i: (i, 0)),
        compiler_params=pltpu.CompilerParams(
            dimension_semantics=("parallel",),
            vmem_limit_bytes=vmem_limit),
        cost_estimate=cost,
    )(logits, labels2, params, n_arr)

    # Tiny wrapper-side combine of per-tile partial sums.
    p = partials.reshape(num_tiles, 8, 128)
    sum_target_s = jnp.sum(p[:, 0, 0])
    sum_cls = jnp.sum(p[:, 1, 0])
    neglog_lkh_loss = -sum_target_s / n
    cls_loss = -sum_cls / n
    return cls_loss + jnp.asarray(r, jnp.float32) * neglog_lkh_loss


def _reference_loss(logits, labels, s, r, cm):
    """Pure-JAX reference mirroring the PyTorch code exactly."""
    n, c = logits.shape
    logits = logits.astype(jnp.float32)
    target = logits[jnp.arange(n), labels]
    numerator = s * (target - cm)
    onehot = jax.nn.one_hot(labels, c, dtype=logits.dtype)
    sum_exp_others = jnp.sum(jnp.exp(s * logits) * (1.0 - onehot), axis=1)
    denominator = jnp.exp(numerator) + sum_exp_others
    neglog_lkh_loss = -jnp.mean(target * s)
    cls_loss = -jnp.mean(numerator - jnp.log(denominator))
    return cls_loss + r * neglog_lkh_loss


if __name__ == "__main__":
    # Deterministic hyper-parameters (module __init__ args) and inputs.
    s, r, cm = 16.0, 0.1, 0.35

    key = jax.random.PRNGKey(0)

    # Test 1: small, lane-narrow class axis (C < 128), single block.
    N1, C1 = 8, 16
    k1, k2, k3, k4 = jax.random.split(key, 4)
    logits1 = 0.1 * jax.random.normal(k1, (N1, C1), dtype=jnp.float32)
    labels1 = jax.random.randint(k2, (N1,), 0, C1, dtype=jnp.int32)
    loss1 = jax.block_until_ready(he_loss_lkh(logits1, labels1, s, r, cm))
    ref1 = jax.block_until_ready(_reference_loss(logits1, labels1, s, r, cm))

    # Test 2: ragged N and non-128-multiple C exercise the partial-block path.
    N2, C2 = 37, 200
    logits2 = 0.05 * jax.random.normal(k3, (N2, C2), dtype=jnp.float32)
    labels2 = jax.random.randint(k4, (N2,), 0, C2, dtype=jnp.int32)
    loss2 = jax.block_until_ready(he_loss_lkh(logits2, labels2, s, r, cm))
    ref2 = jax.block_until_ready(_reference_loss(logits2, labels2, s, r, cm))

    if not jnp.allclose(loss1, ref1, rtol=1e-5, atol=1e-5):
        raise AssertionError(f"mismatch (test1): pallas={loss1} ref={ref1}")
    if not jnp.allclose(loss2, ref2, rtol=1e-5, atol=1e-5):
        raise AssertionError(f"mismatch (test2): pallas={loss2} ref={ref2}")
    print("KERNEL_OK")
</pallas_src>

<mosaic_0001>
module attributes {stable_mosaic.version = 11 : i64} {
  func.func @_he_loss_kernel(%arg0: i32, %arg1: memref<8x16xf32, #tpu.memory_space<vmem>>, %arg2: memref<8x1xi32, #tpu.memory_space<vmem>>, %arg3: memref<2xf32, #tpu.memory_space<smem>>, %arg4: memref<1xi32, #tpu.memory_space<smem>>, %arg5: memref<8x128xf32, #tpu.memory_space<vmem>>) attributes {dimension_semantics = [#tpu.dimension_semantics<parallel>], iteration_bounds = array<i64: 1>, scalar_prefetch = 0 : i64, scratch_operands = 0 : i64, tpu.core_type = #tpu.core_type<tc>, window_params = [{transform_indices = @transform_0, window_bounds = array<i64: 8, 16>}, {transform_indices = @transform_1, window_bounds = array<i64: 8, 1>}, {transform_indices = @transform_2, window_bounds = array<i64: 2>}, {transform_indices = @transform_3, window_bounds = array<i64: 1>}, {transform_indices = @transform_4, window_bounds = array<i64: 8, 128>}]} {
    %c0 = arith.constant 0 : index
    %0 = memref.load %arg3[%c0] : memref<2xf32, #tpu.memory_space<smem>>
    %c1 = arith.constant 1 : index
    %1 = memref.load %arg3[%c1] : memref<2xf32, #tpu.memory_space<smem>>
    %2 = arith.mulf %0, %1 : f32
    %c0_0 = arith.constant 0 : index
    %3 = memref.load %arg4[%c0_0] : memref<1xi32, #tpu.memory_space<smem>>
    %c8_i32 = arith.constant 8 : i32
    %4 = arith.muli %arg0, %c8_i32 : i32
    %5 = tpu.iota {dimensions = array<i32: 0>} : vector<8x1xi32>
    %6 = vector.broadcast %4 : i32 to vector<8x1xi32>
    %7 = arith.addi %6, %5 : vector<8x1xi32>
    %8 = vector.broadcast %3 : i32 to vector<8x1xi32>
    %9 = arith.cmpi slt, %7, %8 : vector<8x1xi32>
    %c0_1 = arith.constant 0 : index
    %c0_2 = arith.constant 0 : index
    %10 = vector.load %arg1[%c0_1, %c0_2] : memref<8x16xf32, #tpu.memory_space<vmem>>, vector<8x16xf32>
    %cst = arith.constant 0.000000e+00 : f32
    %11 = vector.shape_cast %9 : vector<8x1xi1> to vector<8x1xi1>
    %12 = vector.broadcast %11 : vector<8x1xi1> to vector<8x16xi1>
    %13 = vector.broadcast %cst : f32 to vector<8x16xf32>
    %14 = arith.select %12, %10, %13 : vector<8x16xi1>, vector<8x16xf32>
    %c0_3 = arith.constant 0 : index
    %c0_4 = arith.constant 0 : index
    %15 = vector.load %arg2[%c0_3, %c0_4] : memref<8x1xi32, #tpu.memory_space<vmem>>, vector<8x1xi32>
    %16 = tpu.iota {dimensions = array<i32: 1>} : vector<8x16xi32>
    %17 = vector.broadcast %15 : vector<8x1xi32> to vector<8x16xi32>
    %18 = arith.cmpi eq, %16, %17 : vector<8x16xi32>
    %19 = vector.broadcast %0 : f32 to vector<8x16xf32>
    %20 = arith.mulf %19, %14 : vector<8x16xf32>
    %cst_5 = arith.constant 0.000000e+00 : f32
    %21 = vector.broadcast %cst_5 : f32 to vector<8x16xf32>
    %22 = arith.select %18, %20, %21 : vector<8x16xi1>, vector<8x16xf32>
    %cst_6 = arith.constant dense<0.000000e+00> : vector<8xf32>
    %23 = vector.multi_reduction <add>, %22, %cst_6 [1] : vector<8x16xf32> to vector<8xf32>
    %24 = vector.shape_cast %23 : vector<8xf32> to vector<8x1xf32>
    %25 = vector.broadcast %2 : f32 to vector<8x1xf32>
    %26 = arith.subf %24, %25 : vector<8x1xf32>
    %cst_7 = arith.constant 0.000000e+00 : f32
    %27 = vector.broadcast %2 : f32 to vector<8x16xf32>
    %28 = vector.broadcast %cst_7 : f32 to vector<8x16xf32>
    %29 = arith.select %18, %27, %28 : vector<8x16xi1>, vector<8x16xf32>
    %30 = arith.subf %20, %29 : vector<8x16xf32>
    %cst_8 = arith.constant dense<0xFF800000> : vector<8xf32>
    %31 = vector.multi_reduction <maximumf>, %30, %cst_8 [1] : vector<8x16xf32> to vector<8xf32>
    %32 = vector.shape_cast %31 : vector<8xf32> to vector<8x1xf32>
    %33 = vector.broadcast %32 : vector<8x1xf32> to vector<8x16xf32>
    %34 = arith.subf %30, %33 : vector<8x16xf32>
    %35 = math.exp %34 : vector<8x16xf32>
    %cst_9 = arith.constant dense<0.000000e+00> : vector<8xf32>
    %36 = vector.multi_reduction <add>, %35, %cst_9 [1] : vector<8x16xf32> to vector<8xf32>
    %37 = vector.shape_cast %36 : vector<8xf32> to vector<8x1xf32>
    %38 = math.log %37 : vector<8x1xf32>
    %39 = arith.addf %32, %38 : vector<8x1xf32>
    %40 = arith.extui %9 : vector<8x1xi1> to vector<8x1xi32>
    %41 = arith.sitofp %40 : vector<8x1xi32> to vector<8x1xf32>
    %42 = arith.mulf %41, %24 : vector<8x1xf32>
    %43 = vector.shape_cast %42 : vector<8x1xf32> to vector<1x8x1xf32>
    %cst_10 = arith.constant dense<0.000000e+00> : vector<1xf32>
    %44 = vector.multi_reduction <add>, %43, %cst_10 [1, 2] : vector<1x8x1xf32> to vector<1xf32>
    %45 = vector.shape_cast %44 : vector<1xf32> to vector<1x1x1xf32>
    %46 = vector.extract %45[0, 0, 0] : f32 from vector<1x1x1xf32>
    %47 = arith.subf %26, %39 : vector<8x1xf32>
    %48 = arith.mulf %41, %47 : vector<8x1xf32>
    %49 = vector.shape_cast %48 : vector<8x1xf32> to vector<1x8x1xf32>
    %cst_11 = arith.constant dense<0.000000e+00> : vector<1xf32>
    %50 = vector.multi_reduction <add>, %49, %cst_11 [1, 2] : vector<1x8x1xf32> to vector<1xf32>
    %51 = vector.shape_cast %50 : vector<1xf32> to vector<1x1x1xf32>
    %52 = vector.extract %51[0, 0, 0] : f32 from vector<1x1x1xf32>
    %53 = tpu.iota {dimensions = array<i32: 0>} : vector<8x128xi32>
    %c0_i32 = arith.constant 0 : i32
    %54 = vector.broadcast %c0_i32 : i32 to vector<8x128xi32>
    %55 = arith.cmpi eq, %53, %54 : vector<8x128xi32>
    %c1_i32 = arith.constant 1 : i32
    %56 = vector.broadcast %c1_i32 : i32 to vector<8x128xi32>
    %57 = arith.cmpi eq, %53, %56 : vector<8x128xi32>
    %cst_12 = arith.constant 0.000000e+00 : f32
    %58 = vector.broadcast %52 : f32 to vector<8x128xf32>
    %59 = vector.broadcast %cst_12 : f32 to vector<8x128xf32>
    %60 = arith.select %57, %58, %59 : vector<8x128xi1>, vector<8x128xf32>
    %61 = vector.broadcast %46 : f32 to vector<8x128xf32>
    %62 = arith.select %55, %61, %60 : vector<8x128xi1>, vector<8x128xf32>
    %c0_13 = arith.constant 0 : index
    %c0_14 = arith.constant 0 : index
    %63 = vector.load %arg5[%c0_13, %c0_14] : memref<8x128xf32, #tpu.memory_space<vmem>>, vector<8x128xf32>
    tpu.vector_store %arg5[%c0_13, %c0_14], %62 {strides = array<i32>} : memref<8x128xf32, #tpu.memory_space<vmem>>, vector<8x128xf32>,
    return
  }
  func.func @transform_0(%arg0: i32) -> (i32, i32) {
    %c0_i32 = arith.constant 0 : i32
    %c0_i32_0 = arith.constant 0 : i32
    return %arg0, %c0_i32 : i32, i32
  }
  func.func @transform_1(%arg0: i32) -> (i32, i32) {
    %c0_i32 = arith.constant 0 : i32
    %c0_i32_0 = arith.constant 0 : i32
    return %arg0, %c0_i32 : i32, i32
  }
  func.func @transform_2(%arg0: i32) -> i32 {
    %c0_i32 = arith.constant 0 : i32
    %c0_i32_0 = arith.constant 0 : i32
    return %c0_i32 : i32
  }
  func.func @transform_3(%arg0: i32) -> i32 {
    %c0_i32 = arith.constant 0 : i32
    %c0_i32_0 = arith.constant 0 : i32
    return %c0_i32 : i32
  }
  func.func @transform_4(%arg0: i32) -> (i32, i32) {
    %c0_i32 = arith.constant 0 : i32
    %c0_i32_0 = arith.constant 0 : i32
    return %arg0, %c0_i32 : i32, i32
  }
}

</mosaic_0001>

<llo_original>
// kernel: he_loss_lkh.1
$region0: #{he_loss_lkh.1}
  #allocation0 [shape = 'u32[]', space=smem, size = 0x4, offset = 0x4, fixed_abs, tag = 'smem constant byte address 0x4 - core index']
  #allocation1 [shape = 'u32[72,128]{1,0:T(1,128)}', space=vmem, size = 0x9000, scoped, tag = 'internal scratch']
  #allocation2 [shape = 's32[1]{0:T(128)S(6)}', space=smem, size = 0x200, scoped, tag = 'scoped memory for he_loss_lkh.1']
  %s0 = inlined_call_operand.vmem [shape: f32[8,16], index: 0, kind: input, shape index: {}]
  %s1 = inlined_call_operand.vmem [shape: s32[8,1], index: 1, kind: input, shape index: {}]
  %s2 = inlined_call_operand.vmem [shape: f32[2], index: 2, kind: input, shape index: {}]
  %s3 = inlined_call_operand.<no memory space> [shape: s32[1], index: 3, kind: input, shape index: {}]
  %s4 = inlined_call_operand.vmem [shape: f32[8,128], index: 4, kind: output, shape index: {}]
  %s5 = sld [smem:[#allocation0]]
  $region30: #{he_loss_lkh.1} parent=0
    _
  %s7 = ssub.s32 1, %s5
  %s8 = scalar_select 0, %s7, %s5
  %9 = sst [smem:[#allocation2]] %s3
  $region1: #{he_loss_lkh.1} parent=0
    #allocation3 [shape = 'u8[512]{0}', space=smem, size = 0x200, scoped, tag = 'input window, operand 2, single buffered']
    #allocation4 [shape = 's32[1]{0}', space=sflag, size = 0x4, scoped, tag = 'scoped memory for he_loss_lkh.1']
    %10 = vsyncpa [#allocation4], 0
    // Predicated region
    $region2: #{he_loss_lkh.1} parent=1 // pred_check
      _
    $region3: #{he_loss_lkh.1} parent=1 // pred_check_branch
      %12 = sbr.rel (0) target = $region5
    $region4: #{he_loss_lkh.1} parent=1 // pred_region
      _
    $region5: #{he_loss_lkh.1} parent=1 // pred_fallthru
      _
    // Predicated region
    $region6: #{he_loss_lkh.1} parent=1 // pred_check
      _
    $region7: #{he_loss_lkh.1} parent=1 // pred_check_branch
      %14 = sbr.rel (0) target = $region9
    $region8: #{he_loss_lkh.1} parent=1 // pred_region
      _
    $region9: #{he_loss_lkh.1} parent=1 // pred_fallthru
      _
    // Predicated region
    $region10: #{he_loss_lkh.1} parent=1 // pred_check
      _
    $region11: #{he_loss_lkh.1} parent=1 // pred_check_branch
      %16 = sbr.rel (0) target = $region13
    $region12: #{he_loss_lkh.1} parent=1 // pred_region
      %18 = vsyncadd [#allocation4], 0
      %s20 = sshll.u32 %s2, 4
      %s21 = int_to_ptr.vmem [resolvable:$true] %s20
      %23 = dma.vmem_to_smem %s21, 16, [#allocation3], [#allocation4]
    $region13: #{he_loss_lkh.1} parent=1 // pred_fallthru
      _
    // Predicated region
    $region14: #{he_loss_lkh.1} parent=1 // pred_check
      _
    $region15: #{he_loss_lkh.1} parent=1 // pred_check_branch
      %25 = sbr.rel (0) target = $region17
    $region16: #{he_loss_lkh.1} parent=1 // pred_region
      _
    $region17: #{he_loss_lkh.1} parent=1 // pred_fallthru
      _
    // Predicated region
    $region18: #{he_loss_lkh.1} parent=1 // pred_check
      _
    $region19: #{he_loss_lkh.1} parent=1 // pred_check_branch
      %27 = sbr.rel (0) target = $region21
    $region20: #{he_loss_lkh.1} parent=1 // pred_region
      %29 = dma.done [#allocation4], 16
    $region21: #{he_loss_lkh.1} parent=1 // pred_fallthru
      _
    %30 = sfence
    %s31 = sld [smem:[#allocation3]]
    %s32 = sld [smem:[#allocation3 + $0x1]]
    %s33 = smul.f32 %s31, %s32
    %s34 = sld [smem:[#allocation2]]
    %s35 = smul.u32 0, 8
    %v36 = vlaneseq
    %v37 = vshrl.u32 %v36, 7
    %v38 = vstv %s35
    %v39 = vadd.s32 %v38, %v37
    %v40 = vstv %s34
    %vm41 = vcmp.lt.s32.totalorder %v39, %v40
    %v42 = vld [vmem:[%s0] sm:$0xff]
    %v43 = vsel %vm41, 1, 0
    %vm44 = vcmp.eq.s32.totalorder %v43, 1
    %v45 = vsel %vm44, %v42, 0.0
    %v46 = vld [vmem:[%s1] sm:$0xff]
    %v47 = vlaneseq
    %v48 = vand.u32 %v47, 127
    %49 = vset.pattern.permute.xlu0 0
    %50 = vperm.xlu0 %49, %v46
    %v51 = vpop.permute.xlu0 %50
    %vm52 = vcmp.eq.s32.totalorder %v48, %v51
    %v53 = vstv %s31
    %v54 = vmul.f32 %v53, %v45
    %v55 = vsel %vm52, %v54, 0.0
    %vm56 = vcmask 130048
    %v57 = vsel %vm56, %v55, 0.0
    %58 = vadd.xlane.f32.xlu0 %v57
    %v59 = vpop.xlane.xlu0 %58
    %v60 = vstv %s33
    %v61 = vsub.f32 %v59, %v60
    %v62 = vsel %vm52, %v60, 0.0
    %v63 = vsub.f32 %v54, %v62
    %v64 = vsel %vm56, %v63, -inf
    %65 = vmax.xlane.f32.xlu0 %v64
    %v66 = vpop.xlane.xlu0 %65
    %v67 = vsub.f32 %v63, %v66
    %v68 = vmul.f32 %v67, 1.442695
    %v69 = vpow.pop %v68
    %v70 = vsel %vm56, %v69, 0.0
    %71 = vadd.xlane.f32.xlu0 %v70
    %v72 = vpop.xlane.xlu0 %71
    %v73 = vlog2.pop %v72
    %v74 = vmul.f32 %v73, 0.6931472
    %v75 = vadd.f32 %v66, %v74
    %v76 = vcvt.s32.f32 %v43
    %v77 = vmul.f32 %v76, %v59
    %vm78 = vcmask 7168
    %v79 = vsel %vm78, %v77, 0.0
    %80 = vadd.xlane.f32.xlu0 %v79
    %v81 = vpop.xlane.xlu0 %80
    %v82 = vrot.slane %v81, 4
    %v83 = vadd.f32 %v81, %v82
    %v84 = vrot.slane %v83, 2
    %v85 = vadd.f32 %v83, %v84
    %v86 = vrot.slane %v85, 1
    %v87 = vadd.f32 %v85, %v86
    %s88 = vtos %v87
    %v89 = vsub.f32 %v61, %v75
    %v90 = vmul.f32 %v76, %v89
    %v91 = vsel %vm78, %v90, 0.0
    %92 = vadd.xlane.f32.xlu0 %v91
    %v93 = vpop.xlane.xlu0 %92
    %v94 = vrot.slane %v93, 4
    %v95 = vadd.f32 %v93, %v94
    %v96 = vrot.slane %v95, 2
    %v97 = vadd.f32 %v95, %v96
    %v98 = vrot.slane %v97, 1
    %v99 = vadd.f32 %v97, %v98
    %s100 = vtos %v99
    %vm101 = vcmp.eq.s32.totalorder %v37, 0
    %vm102 = vcmp.eq.s32.totalorder %v37, 1
    %v103 = vstv %s100
    %v104 = vsel %vm102, %v103, 0.0
    %v105 = vstv %s88
    %v106 = vsel %vm101, %v105, %v104
    %107 = vst [vmem:[%s4] sm:$0xff] %v106
    // Predicated region
    $region22: #{he_loss_lkh.1} parent=1 // pred_check
      _
    $region23: #{he_loss_lkh.1} parent=1 // pred_check_branch
      %109 = sbr.rel (0) target = $region25
    $region24: #{he_loss_lkh.1} parent=1 // pred_region
      _
    $region25: #{he_loss_lkh.1} parent=1 // pred_fallthru
      _
    // Predicated region
    $region26: #{he_loss_lkh.1} parent=1 // pred_check
      _
    $region27: #{he_loss_lkh.1} parent=1 // pred_check_branch
      %111 = sbr.rel (0) target = $region29
    $region28: #{he_loss_lkh.1} parent=1 // pred_region
      _
    $region29: #{he_loss_lkh.1} parent=1 // pred_fallthru
      _
    %112 = vsyncpa [#allocation4], 1

</llo_original>
